<compile_context>
chip_gen: v7x
topology: tpu7x:2x2x1
jax: 0.10.0
libtpu: 0.0.40
codegen_flags: <defaults>
</compile_context>

<pallas_src>
import functools

import jax
import jax.numpy as jnp
from jax import lax
from jax.experimental import pallas as pl
from jax.experimental.pallas import tpu as pltpu

LANES = 128          # vreg lane width
SUBLANES = 8         # f32 vreg sublanes
CHUNK_ROWS = 128     # rows per in-kernel accumulation chunk (16 f32 vregs/input)
MAX_TILE_ROWS = 2048 # 2048*128*4B = 1 MiB per f32 input block


def _round_up(a, b):
    return -(-a // b) * b


# ---------------------------------------------------------------------------
# Elementwise math (identical semantics to gaussian_focal_loss_imp).
# ---------------------------------------------------------------------------
def _int_pow(x, e):
    """x**e via repeated multiplies (VPU) for small integer e; jnp.power
    (EUP exp/log) only as a fallback for non-integer exponents."""
    ei = int(e)
    if float(ei) == float(e) and 0 <= ei <= 16:
        if ei == 0:
            return jnp.ones_like(x)
        result, base, n = None, x, ei
        while n:
            if n & 1:
                result = base if result is None else result * base
            n >>= 1
            if n:
                base = base * base
        return result
    return jnp.power(x, e)


def _elementwise_loss(p, t, alpha, gamma):
    # pos/neg branches are mutually exclusive: t==1 -> (1-t)^gamma == 0 kills
    # the neg branch; t!=1 -> pos_weight == 0 kills the pos branch.  A single
    # select is therefore exactly equivalent to pos_loss + neg_loss.
    eps = 1e-12
    one_m_p = 1.0 - p
    pos = -jnp.log(p + eps) * _int_pow(one_m_p, alpha)
    neg = -jnp.log(one_m_p + eps) * _int_pow(p, alpha) * _int_pow(1.0 - t, gamma)
    return jnp.where(t == 1.0, pos, neg)


# ---------------------------------------------------------------------------
# Kernels.
# ---------------------------------------------------------------------------
def _gfl_sum_kernel(*refs, alpha, gamma, tile_rows, valid_rows_last, has_weight):
    """Per grid step: (tile_rows,128) block -> (8,128) partial sum.

    Accumulates CHUNK_ROWS-row chunks into one (8,128) accumulator (bounded
    vreg live range).  When the last block is statically ragged, out-of-range
    rows are zeroed with an iota mask (the DMA never reads them from HBM; the
    VMEM contents there are garbage)."""
    if has_weight:
        pred_ref, tgt_ref, w_ref, out_ref = refs
    else:
        pred_ref, tgt_ref, out_ref = refs
        w_ref = None

    ragged = valid_rows_last != tile_rows            # static
    nchunks = tile_rows // CHUNK_ROWS                # static
    if ragged:
        is_last = pl.program_id(0) == pl.num_programs(0) - 1
        limit = jnp.where(is_last, jnp.int32(valid_rows_last),
                          jnp.int32(tile_rows))

    def body(c, acc):
        start = pl.multiple_of(c * CHUNK_ROWS, CHUNK_ROWS)
        p = pred_ref[pl.ds(start, CHUNK_ROWS), :].astype(jnp.float32)
        t = tgt_ref[pl.ds(start, CHUNK_ROWS), :].astype(jnp.float32)
        loss = _elementwise_loss(p, t, alpha, gamma)
        if has_weight:
            loss = loss * w_ref[pl.ds(start, CHUNK_ROWS), :].astype(jnp.float32)
        if ragged:
            row = lax.broadcasted_iota(jnp.int32, loss.shape, 0) + start
            loss = jnp.where(row < limit, loss, 0.0)
        # Regroup whole vregs and add (VPU only, no cross-lane work).
        return acc + loss.reshape(CHUNK_ROWS // SUBLANES, SUBLANES, LANES).sum(0)

    acc = lax.fori_loop(0, nchunks, body,
                        jnp.zeros((SUBLANES, LANES), jnp.float32), unroll=True)
    out_ref[0, :, :] = acc


def _gfl_elem_kernel(*refs, alpha, gamma, has_weight):
    """Per-element loss (optionally weighted).  No masking needed: a partial
    last block only writes its in-bounds rows back to HBM."""
    if has_weight:
        pred_ref, tgt_ref, w_ref, out_ref = refs
    else:
        pred_ref, tgt_ref, out_ref = refs
        w_ref = None
    p = pred_ref[...].astype(jnp.float32)
    t = tgt_ref[...].astype(jnp.float32)
    loss = _elementwise_loss(p, t, alpha, gamma)
    if has_weight:
        loss = loss * w_ref[...].astype(jnp.float32)
    out_ref[...] = loss.astype(out_ref.dtype)


# ---------------------------------------------------------------------------
# Glue.
# ---------------------------------------------------------------------------
def _to_slab(a, rows, lane_pad):
    flat = jnp.asarray(a).reshape(-1)
    if lane_pad:
        # TODO(synk): the only remaining full-copy pad; triggers only when
        # numel % 128 != 0 (at most 127 zeros).  Zero padding is loss-neutral
        # (t=0 kills the pos branch, p=0 kills the neg branch, weight pad = 0).
        flat = jnp.pad(flat, (0, lane_pad))
    return flat.reshape(rows, LANES)


def _choose_tiling(rows):
    # Divisor-aware tiles aligned to CHUNK_ROWS (also keeps bf16 [16,128]
    # packing clean).  Force >= 2 grid steps once there is enough work so
    # v7x's two TensorCores both get blocks on the "parallel" axis
    # (v5e/v6e have one TC and are unaffected).
    min_tiles = 2 if rows > 2 * CHUNK_ROWS else 1
    num_tiles = max(pl.cdiv(rows, MAX_TILE_ROWS), min_tiles)
    tile_rows = _round_up(pl.cdiv(rows, num_tiles), CHUNK_ROWS)
    grid_n = pl.cdiv(rows, tile_rows)
    valid_rows_last = rows - (grid_n - 1) * tile_rows
    return tile_rows, grid_n, valid_rows_last


def _pallas_loss_sum(slabs, tile_rows, grid_n, valid_rows_last, alpha, gamma):
    has_weight = len(slabs) == 3
    rows = slabs[0].shape[0]
    n_eff = rows * LANES
    in_bytes = sum(int(s.size) * s.dtype.itemsize for s in slabs)
    out_bytes = grid_n * SUBLANES * LANES * 4
    in_spec = pl.BlockSpec((tile_rows, LANES), lambda i: (i, 0))
    partials = pl.pallas_call(
        functools.partial(_gfl_sum_kernel, alpha=alpha, gamma=gamma,
                          tile_rows=tile_rows,
                          valid_rows_last=valid_rows_last,
                          has_weight=has_weight),
        out_shape=jax.ShapeDtypeStruct((grid_n, SUBLANES, LANES), jnp.float32),
        grid=(grid_n,),
        in_specs=[in_spec] * len(slabs),
        out_specs=pl.BlockSpec((1, SUBLANES, LANES), lambda i: (i, 0, 0)),
        compiler_params=pltpu.CompilerParams(
            dimension_semantics=("parallel",)),
        cost_estimate=pl.CostEstimate(
            flops=14 * n_eff,
            transcendentals=2 * n_eff,
            bytes_accessed=in_bytes + out_bytes),
    )(*slabs)
    # Tiny (grid_n, 8, 128) tensor; finish the reduction in XLA (f32).
    return jnp.sum(partials)


def _pallas_loss_elementwise(slabs, tile_rows, grid_n, alpha, gamma, out_dtype):
    has_weight = len(slabs) == 3
    rows = slabs[0].shape[0]
    n_eff = rows * LANES
    in_bytes = sum(int(s.size) * s.dtype.itemsize for s in slabs)
    out_bytes = n_eff * jnp.dtype(out_dtype).itemsize
    in_spec = pl.BlockSpec((tile_rows, LANES), lambda i: (i, 0))
    return pl.pallas_call(
        functools.partial(_gfl_elem_kernel, alpha=alpha, gamma=gamma,
                          has_weight=has_weight),
        out_shape=jax.ShapeDtypeStruct((rows, LANES), out_dtype),
        grid=(grid_n,),
        in_specs=[in_spec] * len(slabs),
        out_specs=pl.BlockSpec((tile_rows, LANES), lambda i: (i, 0)),
        compiler_params=pltpu.CompilerParams(
            dimension_semantics=("parallel",)),
        cost_estimate=pl.CostEstimate(
            flops=14 * n_eff,
            transcendentals=2 * n_eff,
            bytes_accessed=in_bytes + out_bytes),
    )(*slabs)


# ---------------------------------------------------------------------------
# Module-equivalent forward.
# ---------------------------------------------------------------------------
def gaussian_focal_loss_bev(
    pred,
    target,
    weight=None,
    avg_factor=None,
    reduction_override=None,
    *,
    alpha=2.0,
    gamma=4.0,
    reduction="mean",
    loss_weight=1.0,
    out_dtype=jnp.float32,   # dtype of the per-element loss on the "none" path
):
    assert reduction_override in (None, "none", "mean", "sum")
    reduction = reduction_override if reduction_override else reduction

    pred = jnp.asarray(pred)
    target = jnp.asarray(target)
    orig_shape = pred.shape
    n = pred.size
    rows = pl.cdiv(n, LANES)
    lane_pad = rows * LANES - n
    tile_rows, grid_n, valid_rows_last = _choose_tiling(rows)

    slabs = [_to_slab(pred, rows, lane_pad), _to_slab(target, rows, lane_pad)]
    if weight is not None:
        slabs.append(_to_slab(weight, rows, lane_pad))

    if reduction in ("mean", "sum"):
        # Fused path: elementwise loss (optionally * weight) + partial-sum
        # reduction in a single kernel.  No full loss tensor ever hits HBM.
        total = _pallas_loss_sum(slabs, tile_rows, grid_n, valid_rows_last,
                                 alpha, gamma)
        if reduction == "mean":
            if avg_factor is None:
                loss = total / jnp.float32(n)
            else:
                loss = total / (jnp.float32(avg_factor)
                                + jnp.finfo(jnp.float32).eps)
        else:  # sum
            if avg_factor is not None:
                raise ValueError(
                    'avg_factor can not be used with reduction="sum"')
            loss = total
        return jnp.float32(loss_weight) * loss

    # reduction == "none": per-element (optionally weighted) loss.
    loss2d = _pallas_loss_elementwise(slabs, tile_rows, grid_n, alpha, gamma,
                                      out_dtype)
    loss = loss2d.reshape(-1)[:n].reshape(orig_shape)
    return jnp.asarray(loss_weight, loss.dtype) * loss


# Pure-JAX reference for verification (mirrors the PyTorch code exactly).
def _reference_elem(pred, target, alpha=2.0, gamma=4.0):
    eps = 1e-12
    pos_w = (target == 1.0).astype(jnp.float32)
    neg_w = jnp.power(1.0 - target, gamma)
    pos_loss = -jnp.log(pred + eps) * jnp.power(1.0 - pred, alpha) * pos_w
    neg_loss = -jnp.log(1.0 - pred + eps) * jnp.power(pred, alpha) * neg_w
    return pos_loss + neg_loss


if __name__ == "__main__":
    # GaussianFocalLoss_bev has no learnable parameters (alpha/gamma/reduction/
    # loss_weight are scalar hyper-parameters), so only inputs are constructed.
    key = jax.random.PRNGKey(0)
    k_pred, k_tgt, k_peak, k_w = jax.random.split(key, 4)

    B, C, H, W = 2, 4, 16, 16  # NCHW, like the PyTorch module
    pred = jax.nn.sigmoid(jax.random.normal(k_pred, (B, C, H, W), jnp.float32))
    target = jax.random.uniform(k_tgt, (B, C, H, W), jnp.float32, 0.0, 0.99)
    peaks = jax.random.bernoulli(k_peak, 0.02, (B, C, H, W))
    target = jnp.where(peaks, jnp.float32(1.0), target)
    weight = jax.random.uniform(k_w, (B, C, H, W), jnp.float32, 0.5, 1.5)

    # 1) default mean — fused sum kernel, single ragged block (rows=16 < 128).
    loss = jax.block_until_ready(gaussian_focal_loss_bev(pred, target))
    ref = jnp.mean(_reference_elem(pred, target))
    assert jnp.allclose(loss, ref, rtol=1e-5, atol=1e-6), (loss, ref)

    # 2) weighted mean with avg_factor — fused weighted-sum kernel.
    af = 17.0
    loss_w = jax.block_until_ready(
        gaussian_focal_loss_bev(pred, target, weight=weight, avg_factor=af))
    ref_w = (jnp.sum(_reference_elem(pred, target) * weight)
             / (jnp.float32(af) + jnp.finfo(jnp.float32).eps))
    assert jnp.allclose(loss_w, ref_w, rtol=1e-5, atol=1e-6), (loss_w, ref_w)

    # 3) weighted "none" — elementwise kernel with fused weight.
    loss_none = jax.block_until_ready(
        gaussian_focal_loss_bev(pred, target, weight=weight,
                                reduction_override="none"))
    ref_none = _reference_elem(pred, target) * weight
    assert jnp.allclose(loss_none, ref_none, rtol=1e-5, atol=1e-6)

    # 4) non-lane-aligned numel — exercises the lane-tail pad + ragged masking.
    kp2, kt2 = jax.random.split(jax.random.PRNGKey(1))
    shape2 = (2, 3, 13, 7)  # numel = 546, not a multiple of 128
    pred2 = jax.nn.sigmoid(jax.random.normal(kp2, shape2, jnp.float32))
    target2 = jax.random.uniform(kt2, shape2, jnp.float32, 0.0, 1.0)
    loss2 = jax.block_until_ready(
        gaussian_focal_loss_bev(pred2, target2, reduction_override="sum"))
    ref2 = jnp.sum(_reference_elem(pred2, target2))
    assert jnp.allclose(loss2, ref2, rtol=1e-5, atol=1e-4), (loss2, ref2)

    # 5) multi-block grid (grid_n >= 2, even tiles, no masking).
    kp3, kt3 = jax.random.split(jax.random.PRNGKey(2))
    shape3 = (2, 4, 64, 128)  # rows = 512 -> 2 grid steps of 256 rows
    pred3 = jax.nn.sigmoid(jax.random.normal(kp3, shape3, jnp.float32))
    target3 = jax.random.uniform(kt3, shape3, jnp.float32, 0.0, 1.0)
    loss3 = jax.block_until_ready(gaussian_focal_loss_bev(pred3, target3))
    ref3 = jnp.mean(_reference_elem(pred3, target3))
    assert jnp.allclose(loss3, ref3, rtol=1e-5, atol=1e-6), (loss3, ref3)

    print("KERNEL_OK")
</pallas_src>

<mosaic_0001>
module attributes {stable_mosaic.version = 11 : i64} {
  func.func @_gfl_sum_kernel(%arg0: i32, %arg1: memref<128x128xf32, #tpu.memory_space<vmem>>, %arg2: memref<128x128xf32, #tpu.memory_space<vmem>>, %arg3: memref<1x8x128xf32, #tpu.memory_space<vmem>>) attributes {dimension_semantics = [#tpu.dimension_semantics<parallel>], iteration_bounds = array<i64: 1>, scalar_prefetch = 0 : i64, scratch_operands = 0 : i64, tpu.core_type = #tpu.core_type<tc>, window_params = [{transform_indices = @transform_0, window_bounds = array<i64: 128, 128>}, {transform_indices = @transform_1, window_bounds = array<i64: 128, 128>}, {transform_indices = @transform_2, window_bounds = array<i64: 1, 8, 128>}]} {
    %c0_i32 = arith.constant 0 : i32
    %0 = arith.cmpi eq, %arg0, %c0_i32 : i32
    %c16_i32 = arith.constant 16 : i32
    %c128_i32 = arith.constant 128 : i32
    %1 = arith.select %0, %c16_i32, %c128_i32 : i32
    %cst = arith.constant 0.000000e+00 : f32
    %2 = vector.broadcast %cst : f32 to vector<8x128xf32>
    %c0_i32_0 = arith.constant 0 : i32
    %c128_i32_1 = arith.constant 128 : i32
    %3 = arith.muli %c0_i32_0, %c128_i32_1 : i32
    %4 = tpu.assume_multiple %3, 128 : i32
    %5 = arith.index_cast %4 : i32 to index
    %c0 = arith.constant 0 : index
    %6 = vector.load %arg1[%5, %c0] : memref<128x128xf32, #tpu.memory_space<vmem>>, vector<128x128xf32>
    %7 = arith.index_cast %4 : i32 to index
    %c0_2 = arith.constant 0 : index
    %8 = vector.load %arg2[%7, %c0_2] : memref<128x128xf32, #tpu.memory_space<vmem>>, vector<128x128xf32>
    %cst_3 = arith.constant 1.000000e+00 : f32
    %9 = vector.broadcast %cst_3 : f32 to vector<128x128xf32>
    %10 = arith.subf %9, %6 : vector<128x128xf32>
    %cst_4 = arith.constant 9.99999996E-13 : f32
    %11 = vector.broadcast %cst_4 : f32 to vector<128x128xf32>
    %12 = arith.addf %6, %11 : vector<128x128xf32>
    %13 = math.log %12 : vector<128x128xf32>
    %cst_5 = arith.constant 0.000000e+00 : f32
    %14 = vector.broadcast %cst_5 : f32 to vector<128x128xf32>
    %15 = arith.subf %14, %13 : vector<128x128xf32>
    %16 = arith.mulf %10, %10 : vector<128x128xf32>
    %17 = arith.mulf %15, %16 : vector<128x128xf32>
    %cst_6 = arith.constant 9.99999996E-13 : f32
    %18 = vector.broadcast %cst_6 : f32 to vector<128x128xf32>
    %19 = arith.addf %10, %18 : vector<128x128xf32>
    %20 = math.log %19 : vector<128x128xf32>
    %cst_7 = arith.constant 0.000000e+00 : f32
    %21 = vector.broadcast %cst_7 : f32 to vector<128x128xf32>
    %22 = arith.subf %21, %20 : vector<128x128xf32>
    %23 = arith.mulf %6, %6 : vector<128x128xf32>
    %24 = arith.mulf %22, %23 : vector<128x128xf32>
    %cst_8 = arith.constant 1.000000e+00 : f32
    %25 = vector.broadcast %cst_8 : f32 to vector<128x128xf32>
    %26 = arith.subf %25, %8 : vector<128x128xf32>
    %27 = arith.mulf %26, %26 : vector<128x128xf32>
    %28 = arith.mulf %27, %27 : vector<128x128xf32>
    %29 = arith.mulf %24, %28 : vector<128x128xf32>
    %cst_9 = arith.constant 1.000000e+00 : f32
    %30 = vector.broadcast %cst_9 : f32 to vector<128x128xf32>
    %31 = arith.cmpf oeq, %8, %30 : vector<128x128xf32>
    %32 = arith.select %31, %17, %29 : vector<128x128xi1>, vector<128x128xf32>
    %33 = tpu.iota {dimensions = array<i32: 0>} : vector<128x128xi32>
    %34 = vector.broadcast %4 : i32 to vector<128x128xi32>
    %35 = arith.addi %33, %34 : vector<128x128xi32>
    %36 = vector.broadcast %1 : i32 to vector<128x128xi32>
    %37 = arith.cmpi slt, %35, %36 : vector<128x128xi32>
    %cst_10 = arith.constant 0.000000e+00 : f32
    %38 = vector.broadcast %cst_10 : f32 to vector<128x128xf32>
    %39 = arith.select %37, %32, %38 : vector<128x128xi1>, vector<128x128xf32>
    %40 = vector.shape_cast %39 : vector<128x128xf32> to vector<16x8x128xf32>
    %cst_11 = arith.constant dense<0.000000e+00> : vector<8x128xf32>
    %41 = vector.multi_reduction <add>, %40, %cst_11 [0] : vector<16x8x128xf32> to vector<8x128xf32>
    %42 = arith.addf %2, %41 : vector<8x128xf32>
    %c1_i32 = arith.constant 1 : i32
    %c0_12 = arith.constant 0 : index
    %c0_13 = arith.constant 0 : index
    %c0_14 = arith.constant 0 : index
    %43 = vector.load %arg3[%c0_12, %c0_13, %c0_14] : memref<1x8x128xf32, #tpu.memory_space<vmem>>, vector<1x8x128xf32>
    %44 = vector.shape_cast %43 : vector<1x8x128xf32> to vector<8x128xf32>
    %45 = vector.shape_cast %42 : vector<8x128xf32> to vector<1x8x128xf32>
    tpu.vector_store %arg3[%c0_12, %c0_13, %c0_14], %45 {strides = array<i32>} : memref<1x8x128xf32, #tpu.memory_space<vmem>>, vector<1x8x128xf32>,
    return
  }
  func.func @transform_0(%arg0: i32) -> (i32, i32) {
    %c0_i32 = arith.constant 0 : i32
    %c0_i32_0 = arith.constant 0 : i32
    return %arg0, %c0_i32 : i32, i32
  }
  func.func @transform_1(%arg0: i32) -> (i32, i32) {
    %c0_i32 = arith.constant 0 : i32
    %c0_i32_0 = arith.constant 0 : i32
    return %arg0, %c0_i32 : i32, i32
  }
  func.func @transform_2(%arg0: i32) -> (i32, i32, i32) {
    %c0_i32 = arith.constant 0 : i32
    %c0_i32_0 = arith.constant 0 : i32
    %c0_i32_1 = arith.constant 0 : i32
    return %arg0, %c0_i32, %c0_i32_0 : i32, i32, i32
  }
}

</mosaic_0001>

<llo_original>
// kernel: tpu_custom_call.1
$region0: #{tpu_custom_call.1}
  #allocation0 [shape = 'u32[]', space=smem, size = 0x4, offset = 0x4, fixed_abs, tag = 'smem constant byte address 0x4 - core index']
  #allocation1 [shape = 'u32[144,128]{1,0:T(1,128)}', space=vmem, size = 0x12000, scoped, tag = 'internal scratch']
  %s0 = inlined_call_operand.hbm [shape: f32[16,128], index: 0, kind: input, shape index: {}]
  %s1 = inlined_call_operand.hbm [shape: f32[16,128], index: 1, kind: input, shape index: {}]
  %s2 = inlined_call_operand.hbm [shape: f32[1,8,128], index: 2, kind: output, shape index: {}]
  %s3 = sld [smem:[#allocation0]]
  $region26: #{tpu_custom_call.1} parent=0
    _
  %s5 = ssub.s32 1, %s3
  %s6 = scalar_select 0, %s5, %s3
  $region1: #{tpu_custom_call.1} parent=0
    #allocation2 [shape = 'u8[65536]{0}', space=vmem, size = 0x10000, scoped, tag = 'input window, operand 0, single buffered']
    #allocation3 [shape = 's32[1]{0}', space=sflag, size = 0x4, scoped, tag = 'scoped memory for tpu_custom_call.1']
    #allocation4 [shape = 's32[1]{0}', space=sflag, size = 0x4, scoped, tag = 'scoped memory for tpu_custom_call.1']
    #allocation5 [shape = 'u8[65536]{0}', space=vmem, size = 0x10000, scoped, tag = 'input window, operand 1, single buffered']
    #allocation6 [shape = 's32[1]{0}', space=sflag, size = 0x4, scoped, tag = 'scoped memory for tpu_custom_call.1']
    #allocation7 [shape = 'u8[4096]{0}', space=vmem, size = 0x1000, scoped, tag = 'output window, operand 0, single buffered']
    %7 = vsyncpa [#allocation3], 0
    %8 = vsyncpa [#allocation6], 0
    %9 = vsyncpa [#allocation4], 0
    // Predicated region
    $region2: #{tpu_custom_call.1} parent=1 // pred_check
      _
    $region3: #{tpu_custom_call.1} parent=1 // pred_check_branch
      %11 = sbr.rel (0) target = $region5
    $region4: #{tpu_custom_call.1} parent=1 // pred_region
      %s13 = ssub.s32 2048, 256
      %14 = vsyncadd [#allocation3], %s13
      %s15 = sshll.u32 [#allocation2], 4
      %s16 = int_to_ptr.vmem [resolvable:$true] %s15
      %21 = dma.hbm_to_vmem [thread:$0]  %s0, 256, %s16, [#allocation3], 128, 128, 8
    $region5: #{tpu_custom_call.1} parent=1 // pred_fallthru
      _
    // Predicated region
    $region6: #{tpu_custom_call.1} parent=1 // pred_check
      _
    $region7: #{tpu_custom_call.1} parent=1 // pred_check_branch
      %23 = sbr.rel (0) target = $region9
    $region8: #{tpu_custom_call.1} parent=1 // pred_region
      %s25 = ssub.s32 2048, 256
      %26 = vsyncadd [#allocation6], %s25
      %s27 = sshll.u32 [#allocation5], 4
      %s28 = int_to_ptr.vmem [resolvable:$true] %s27
      %33 = dma.hbm_to_vmem [thread:$0]  %s1, 256, %s28, [#allocation6], 128, 128, 8
    $region9: #{tpu_custom_call.1} parent=1 // pred_fallthru
      _
    // Predicated region
    $region10: #{tpu_custom_call.1} parent=1 // pred_check
      _
    $region11: #{tpu_custom_call.1} parent=1 // pred_check_branch
      %35 = sbr.rel (0) target = $region13
    $region12: #{tpu_custom_call.1} parent=1 // pred_region
      %36 = dma.done [#allocation3], 2048
    $region13: #{tpu_custom_call.1} parent=1 // pred_fallthru
      _
    // Predicated region
    $region14: #{tpu_custom_call.1} parent=1 // pred_check
      _
    $region15: #{tpu_custom_call.1} parent=1 // pred_check_branch
      %38 = sbr.rel (0) target = $region17
    $region16: #{tpu_custom_call.1} parent=1 // pred_region
      %39 = dma.done [#allocation6], 2048
    $region17: #{tpu_custom_call.1} parent=1 // pred_fallthru
      _
    %p40 = scmp.eq.s32.totalorder 0, 0
    %s41 = scalar_select %p40, 16, 128
    %v42 = vld [vmem:[#allocation2] sm:$0xff]
    %v43 = vld [vmem:[#allocation2 + $0x8] sm:$0xff]
    %v44 = vld [vmem:[#allocation2 + $0x10] sm:$0xff]
    %v45 = vld [vmem:[#allocation2 + $0x18] sm:$0xff]
    %v46 = vld [vmem:[#allocation2 + $0x20] sm:$0xff]
    %v47 = vld [vmem:[#allocation2 + $0x28] sm:$0xff]
    %v48 = vld [vmem:[#allocation2 + $0x30] sm:$0xff]
    %v49 = vld [vmem:[#allocation2 + $0x38] sm:$0xff]
    %v50 = vld [vmem:[#allocation2 + $0x40] sm:$0xff]
    %v51 = vld [vmem:[#allocation2 + $0x48] sm:$0xff]
    %v52 = vld [vmem:[#allocation2 + $0x50] sm:$0xff]
    %v53 = vld [vmem:[#allocation2 + $0x58] sm:$0xff]
    %v54 = vld [vmem:[#allocation2 + $0x60] sm:$0xff]
    %v55 = vld [vmem:[#allocation2 + $0x68] sm:$0xff]
    %v56 = vld [vmem:[#allocation2 + $0x70] sm:$0xff]
    %v57 = vld [vmem:[#allocation2 + $0x78] sm:$0xff]
    %v58 = vld [vmem:[#allocation5] sm:$0xff]
    %v59 = vld [vmem:[#allocation5 + $0x8] sm:$0xff]
    %v60 = vld [vmem:[#allocation5 + $0x10] sm:$0xff]
    %v61 = vld [vmem:[#allocation5 + $0x18] sm:$0xff]
    %v62 = vld [vmem:[#allocation5 + $0x20] sm:$0xff]
    %v63 = vld [vmem:[#allocation5 + $0x28] sm:$0xff]
    %v64 = vld [vmem:[#allocation5 + $0x30] sm:$0xff]
    %v65 = vld [vmem:[#allocation5 + $0x38] sm:$0xff]
    %v66 = vld [vmem:[#allocation5 + $0x40] sm:$0xff]
    %v67 = vld [vmem:[#allocation5 + $0x48] sm:$0xff]
    %v68 = vld [vmem:[#allocation5 + $0x50] sm:$0xff]
    %v69 = vld [vmem:[#allocation5 + $0x58] sm:$0xff]
    %v70 = vld [vmem:[#allocation5 + $0x60] sm:$0xff]
    %v71 = vld [vmem:[#allocation5 + $0x68] sm:$0xff]
    %v72 = vld [vmem:[#allocation5 + $0x70] sm:$0xff]
    %v73 = vld [vmem:[#allocation5 + $0x78] sm:$0xff]
    %v74 = vsub.f32 1.0, %v42
    %v75 = vsub.f32 1.0, %v43
    %v76 = vsub.f32 1.0, %v44
    %v77 = vsub.f32 1.0, %v45
    %v78 = vsub.f32 1.0, %v46
    %v79 = vsub.f32 1.0, %v47
    %v80 = vsub.f32 1.0, %v48
    %v81 = vsub.f32 1.0, %v49
    %v82 = vsub.f32 1.0, %v50
    %v83 = vsub.f32 1.0, %v51
    %v84 = vsub.f32 1.0, %v52
    %v85 = vsub.f32 1.0, %v53
    %v86 = vsub.f32 1.0, %v54
    %v87 = vsub.f32 1.0, %v55
    %v88 = vsub.f32 1.0, %v56
    %v89 = vsub.f32 1.0, %v57
    %v90 = vadd.f32 %v42, 1e-12
    %v91 = vadd.f32 %v43, 1e-12
    %v92 = vadd.f32 %v44, 1e-12
    %v93 = vadd.f32 %v45, 1e-12
    %v94 = vadd.f32 %v46, 1e-12
    %v95 = vadd.f32 %v47, 1e-12
    %v96 = vadd.f32 %v48, 1e-12
    %v97 = vadd.f32 %v49, 1e-12
    %v98 = vadd.f32 %v50, 1e-12
    %v99 = vadd.f32 %v51, 1e-12
    %v100 = vadd.f32 %v52, 1e-12
    %v101 = vadd.f32 %v53, 1e-12
    %v102 = vadd.f32 %v54, 1e-12
    %v103 = vadd.f32 %v55, 1e-12
    %v104 = vadd.f32 %v56, 1e-12
    %v105 = vadd.f32 %v57, 1e-12
    %v106 = vlog2.pop %v90
    %v107 = vmul.f32 %v106, 0.6931472
    %v108 = vlog2.pop %v91
    %v109 = vmul.f32 %v108, 0.6931472
    %v110 = vlog2.pop %v92
    %v111 = vmul.f32 %v110, 0.6931472
    %v112 = vlog2.pop %v93
    %v113 = vmul.f32 %v112, 0.6931472
    %v114 = vlog2.pop %v94
    %v115 = vmul.f32 %v114, 0.6931472
    %v116 = vlog2.pop %v95
    %v117 = vmul.f32 %v116, 0.6931472
    %v118 = vlog2.pop %v96
    %v119 = vmul.f32 %v118, 0.6931472
    %v120 = vlog2.pop %v97
    %v121 = vmul.f32 %v120, 0.6931472
    %v122 = vlog2.pop %v98
    %v123 = vmul.f32 %v122, 0.6931472
    %v124 = vlog2.pop %v99
    %v125 = vmul.f32 %v124, 0.6931472
    %v126 = vlog2.pop %v100
    %v127 = vmul.f32 %v126, 0.6931472
    %v128 = vlog2.pop %v101
    %v129 = vmul.f32 %v128, 0.6931472
    %v130 = vlog2.pop %v102
    %v131 = vmul.f32 %v130, 0.6931472
    %v132 = vlog2.pop %v103
    %v133 = vmul.f32 %v132, 0.6931472
    %v134 = vlog2.pop %v104
    %v135 = vmul.f32 %v134, 0.6931472
    %v136 = vlog2.pop %v105
    %v137 = vmul.f32 %v136, 0.6931472
    %v138 = vsub.f32 0.0, %v107
    %v139 = vsub.f32 0.0, %v109
    %v140 = vsub.f32 0.0, %v111
    %v141 = vsub.f32 0.0, %v113
    %v142 = vsub.f32 0.0, %v115
    %v143 = vsub.f32 0.0, %v117
    %v144 = vsub.f32 0.0, %v119
    %v145 = vsub.f32 0.0, %v121
    %v146 = vsub.f32 0.0, %v123
    %v147 = vsub.f32 0.0, %v125
    %v148 = vsub.f32 0.0, %v127
    %v149 = vsub.f32 0.0, %v129
    %v150 = vsub.f32 0.0, %v131
    %v151 = vsub.f32 0.0, %v133
    %v152 = vsub.f32 0.0, %v135
    %v153 = vsub.f32 0.0, %v137
    %v154 = vmul.f32 %v74, %v74
    %v155 = vmul.f32 %v75, %v75
    %v156 = vmul.f32 %v76, %v76
    %v157 = vmul.f32 %v77, %v77
    %v158 = vmul.f32 %v78, %v78
    %v159 = vmul.f32 %v79, %v79
    %v160 = vmul.f32 %v80, %v80
    %v161 = vmul.f32 %v81, %v81
    %v162 = vmul.f32 %v82, %v82
    %v163 = vmul.f32 %v83, %v83
    %v164 = vmul.f32 %v84, %v84
    %v165 = vmul.f32 %v85, %v85
    %v166 = vmul.f32 %v86, %v86
    %v167 = vmul.f32 %v87, %v87
    %v168 = vmul.f32 %v88, %v88
    %v169 = vmul.f32 %v89, %v89
    %v170 = vmul.f32 %v138, %v154
    %v171 = vmul.f32 %v139, %v155
    %v172 = vmul.f32 %v140, %v156
    %v173 = vmul.f32 %v141, %v157
    %v174 = vmul.f32 %v142, %v158
    %v175 = vmul.f32 %v143, %v159
    %v176 = vmul.f32 %v144, %v160
    %v177 = vmul.f32 %v145, %v161
    %v178 = vmul.f32 %v146, %v162
    %v179 = vmul.f32 %v147, %v163
    %v180 = vmul.f32 %v148, %v164
    %v181 = vmul.f32 %v149, %v165
    %v182 = vmul.f32 %v150, %v166
    %v183 = vmul.f32 %v151, %v167
    %v184 = vmul.f32 %v152, %v168
    %v185 = vmul.f32 %v153, %v169
    %v186 = vadd.f32 %v74, 1e-12
    %v187 = vadd.f32 %v75, 1e-12
    %v188 = vadd.f32 %v76, 1e-12
    %v189 = vadd.f32 %v77, 1e-12
    %v190 = vadd.f32 %v78, 1e-12
    %v191 = vadd.f32 %v79, 1e-12
    %v192 = vadd.f32 %v80, 1e-12
    %v193 = vadd.f32 %v81, 1e-12
    %v194 = vadd.f32 %v82, 1e-12
    %v195 = vadd.f32 %v83, 1e-12
    %v196 = vadd.f32 %v84, 1e-12
    %v197 = vadd.f32 %v85, 1e-12
    %v198 = vadd.f32 %v86, 1e-12
    %v199 = vadd.f32 %v87, 1e-12
    %v200 = vadd.f32 %v88, 1e-12
    %v201 = vadd.f32 %v89, 1e-12
    %v202 = vlog2.pop %v186
    %v203 = vmul.f32 %v202, 0.6931472
    %v204 = vlog2.pop %v187
    %v205 = vmul.f32 %v204, 0.6931472
    %v206 = vlog2.pop %v188
    %v207 = vmul.f32 %v206, 0.6931472
    %v208 = vlog2.pop %v189
    %v209 = vmul.f32 %v208, 0.6931472
    %v210 = vlog2.pop %v190
    %v211 = vmul.f32 %v210, 0.6931472
    %v212 = vlog2.pop %v191
    %v213 = vmul.f32 %v212, 0.6931472
    %v214 = vlog2.pop %v192
    %v215 = vmul.f32 %v214, 0.6931472
    %v216 = vlog2.pop %v193
    %v217 = vmul.f32 %v216, 0.6931472
    %v218 = vlog2.pop %v194
    %v219 = vmul.f32 %v218, 0.6931472
    %v220 = vlog2.pop %v195
    %v221 = vmul.f32 %v220, 0.6931472
    %v222 = vlog2.pop %v196
    %v223 = vmul.f32 %v222, 0.6931472
    %v224 = vlog2.pop %v197
    %v225 = vmul.f32 %v224, 0.6931472
    %v226 = vlog2.pop %v198
    %v227 = vmul.f32 %v226, 0.6931472
    %v228 = vlog2.pop %v199
    %v229 = vmul.f32 %v228, 0.6931472
    %v230 = vlog2.pop %v200
    %v231 = vmul.f32 %v230, 0.6931472
    %v232 = vlog2.pop %v201
    %v233 = vmul.f32 %v232, 0.6931472
    %v234 = vsub.f32 0.0, %v203
    %v235 = vsub.f32 0.0, %v205
    %v236 = vsub.f32 0.0, %v207
    %v237 = vsub.f32 0.0, %v209
    %v238 = vsub.f32 0.0, %v211
    %v239 = vsub.f32 0.0, %v213
    %v240 = vsub.f32 0.0, %v215
    %v241 = vsub.f32 0.0, %v217
    %v242 = vsub.f32 0.0, %v219
    %v243 = vsub.f32 0.0, %v221
    %v244 = vsub.f32 0.0, %v223
    %v245 = vsub.f32 0.0, %v225
    %v246 = vsub.f32 0.0, %v227
    %v247 = vsub.f32 0.0, %v229
    %v248 = vsub.f32 0.0, %v231
    %v249 = vsub.f32 0.0, %v233
    %v250 = vmul.f32 %v42, %v42
    %v251 = vmul.f32 %v43, %v43
    %v252 = vmul.f32 %v44, %v44
    %v253 = vmul.f32 %v45, %v45
    %v254 = vmul.f32 %v46, %v46
    %v255 = vmul.f32 %v47, %v47
    %v256 = vmul.f32 %v48, %v48
    %v257 = vmul.f32 %v49, %v49
    %v258 = vmul.f32 %v50, %v50
    %v259 = vmul.f32 %v51, %v51
    %v260 = vmul.f32 %v52, %v52
    %v261 = vmul.f32 %v53, %v53
    %v262 = vmul.f32 %v54, %v54
    %v263 = vmul.f32 %v55, %v55
    %v264 = vmul.f32 %v56, %v56
    %v265 = vmul.f32 %v57, %v57
    %v266 = vmul.f32 %v234, %v250
    %v267 = vmul.f32 %v235, %v251
    %v268 = vmul.f32 %v236, %v252
    %v269 = vmul.f32 %v237, %v253
    %v270 = vmul.f32 %v238, %v254
    %v271 = vmul.f32 %v239, %v255
    %v272 = vmul.f32 %v240, %v256
    %v273 = vmul.f32 %v241, %v257
    %v274 = vmul.f32 %v242, %v258
    %v275 = vmul.f32 %v243, %v259
    %v276 = vmul.f32 %v244, %v260
    %v277 = vmul.f32 %v245, %v261
    %v278 = vmul.f32 %v246, %v262
    %v279 = vmul.f32 %v247, %v263
    %v280 = vmul.f32 %v248, %v264
    %v281 = vmul.f32 %v249, %v265
    %v282 = vsub.f32 1.0, %v58
    %v283 = vsub.f32 1.0, %v59
    %v284 = vsub.f32 1.0, %v60
    %v285 = vsub.f32 1.0, %v61
    %v286 = vsub.f32 1.0, %v62
    %v287 = vsub.f32 1.0, %v63
    %v288 = vsub.f32 1.0, %v64
    %v289 = vsub.f32 1.0, %v65
    %v290 = vsub.f32 1.0, %v66
    %v291 = vsub.f32 1.0, %v67
    %v292 = vsub.f32 1.0, %v68
    %v293 = vsub.f32 1.0, %v69
    %v294 = vsub.f32 1.0, %v70
    %v295 = vsub.f32 1.0, %v71
    %v296 = vsub.f32 1.0, %v72
    %v297 = vsub.f32 1.0, %v73
    %v298 = vmul.f32 %v282, %v282
    %v299 = vmul.f32 %v283, %v283
    %v300 = vmul.f32 %v284, %v284
    %v301 = vmul.f32 %v285, %v285
    %v302 = vmul.f32 %v286, %v286
    %v303 = vmul.f32 %v287, %v287
    %v304 = vmul.f32 %v288, %v288
    %v305 = vmul.f32 %v289, %v289
    %v306 = vmul.f32 %v290, %v290
    %v307 = vmul.f32 %v291, %v291
    %v308 = vmul.f32 %v292, %v292
    %v309 = vmul.f32 %v293, %v293
    %v310 = vmul.f32 %v294, %v294
    %v311 = vmul.f32 %v295, %v295
    %v312 = vmul.f32 %v296, %v296
    %v313 = vmul.f32 %v297, %v297
    %v314 = vmul.f32 %v298, %v298
    %v315 = vmul.f32 %v299, %v299
    %v316 = vmul.f32 %v300, %v300
    %v317 = vmul.f32 %v301, %v301
    %v318 = vmul.f32 %v302, %v302
    %v319 = vmul.f32 %v303, %v303
    %v320 = vmul.f32 %v304, %v304
    %v321 = vmul.f32 %v305, %v305
    %v322 = vmul.f32 %v306, %v306
    %v323 = vmul.f32 %v307, %v307
    %v324 = vmul.f32 %v308, %v308
    %v325 = vmul.f32 %v309, %v309
    %v326 = vmul.f32 %v310, %v310
    %v327 = vmul.f32 %v311, %v311
    %v328 = vmul.f32 %v312, %v312
    %v329 = vmul.f32 %v313, %v313
    %v330 = vmul.f32 %v266, %v314
    %v331 = vmul.f32 %v267, %v315
    %v332 = vmul.f32 %v268, %v316
    %v333 = vmul.f32 %v269, %v317
    %v334 = vmul.f32 %v270, %v318
    %v335 = vmul.f32 %v271, %v319
    %v336 = vmul.f32 %v272, %v320
    %v337 = vmul.f32 %v273, %v321
    %v338 = vmul.f32 %v274, %v322
    %v339 = vmul.f32 %v275, %v323
    %v340 = vmul.f32 %v276, %v324
    %v341 = vmul.f32 %v277, %v325
    %v342 = vmul.f32 %v278, %v326
    %v343 = vmul.f32 %v279, %v327
    %v344 = vmul.f32 %v280, %v328
    %v345 = vmul.f32 %v281, %v329
    %vm346 = vcmp.eq.f32.partialorder %v58, 1.0
    %vm347 = vcmp.eq.f32.partialorder %v59, 1.0
    %vm348 = vcmp.eq.f32.partialorder %v60, 1.0
    %vm349 = vcmp.eq.f32.partialorder %v61, 1.0
    %vm350 = vcmp.eq.f32.partialorder %v62, 1.0
    %vm351 = vcmp.eq.f32.partialorder %v63, 1.0
    %vm352 = vcmp.eq.f32.partialorder %v64, 1.0
    %vm353 = vcmp.eq.f32.partialorder %v65, 1.0
    %vm354 = vcmp.eq.f32.partialorder %v66, 1.0
    %vm355 = vcmp.eq.f32.partialorder %v67, 1.0
    %vm356 = vcmp.eq.f32.partialorder %v68, 1.0
    %vm357 = vcmp.eq.f32.partialorder %v69, 1.0
    %vm358 = vcmp.eq.f32.partialorder %v70, 1.0
    %vm359 = vcmp.eq.f32.partialorder %v71, 1.0
    %vm360 = vcmp.eq.f32.partialorder %v72, 1.0
    %vm361 = vcmp.eq.f32.partialorder %v73, 1.0
    %v362 = vsel %vm346, %v170, %v330
    %v363 = vsel %vm347, %v171, %v331
    %v364 = vsel %vm348, %v172, %v332
    %v365 = vsel %vm349, %v173, %v333
    %v366 = vsel %vm350, %v174, %v334
    %v367 = vsel %vm351, %v175, %v335
    %v368 = vsel %vm352, %v176, %v336
    %v369 = vsel %vm353, %v177, %v337
    %v370 = vsel %vm354, %v178, %v338
    %v371 = vsel %vm355, %v179, %v339
    %v372 = vsel %vm356, %v180, %v340
    %v373 = vsel %vm357, %v181, %v341
    %v374 = vsel %vm358, %v182, %v342
    %v375 = vsel %vm359, %v183, %v343
    %v376 = vsel %vm360, %v184, %v344
    %v377 = vsel %vm361, %v185, %v345
    %v378 = vlaneseq
    %v379 = vshrl.u32 %v378, 7
    %v380 = vadd.s32 %v379, 8
    %v381 = vadd.s32 %v379, 16
    %v382 = vadd.s32 %v379, 24
    %v383 = vadd.s32 %v379, 32
    %v384 = vadd.s32 %v379, 40
    %v385 = vadd.s32 %v379, 48
    %v386 = vadd.s32 %v379, 56
    %v387 = vadd.s32 %v379, 64
    %v388 = vadd.s32 %v379, 72
    %v389 = vadd.s32 %v379, 80
    %v390 = vadd.s32 %v379, 88
    %v391 = vadd.s32 %v379, 96
    %v392 = vadd.s32 %v379, 104
    %v393 = vadd.s32 %v379, 112
    %v394 = vadd.s32 %v379, 120
    %v395 = vstv 0
    %v396 = vadd.s32 %v379, %v395
    %v397 = vadd.s32 %v380, %v395
    %v398 = vadd.s32 %v381, %v395
    %v399 = vadd.s32 %v382, %v395
    %v400 = vadd.s32 %v383, %v395
    %v401 = vadd.s32 %v384, %v395
    %v402 = vadd.s32 %v385, %v395
    %v403 = vadd.s32 %v386, %v395
    %v404 = vadd.s32 %v387, %v395
    %v405 = vadd.s32 %v388, %v395
    %v406 = vadd.s32 %v389, %v395
    %v407 = vadd.s32 %v390, %v395
    %v408 = vadd.s32 %v391, %v395
    %v409 = vadd.s32 %v392, %v395
    %v410 = vadd.s32 %v393, %v395
    %v411 = vadd.s32 %v394, %v395
    %v412 = vstv %s41
    %vm413 = vcmp.lt.s32.totalorder %v396, %v412
    %vm414 = vcmp.lt.s32.totalorder %v397, %v412
    %vm415 = vcmp.lt.s32.totalorder %v398, %v412
    %vm416 = vcmp.lt.s32.totalorder %v399, %v412
    %vm417 = vcmp.lt.s32.totalorder %v400, %v412
    %vm418 = vcmp.lt.s32.totalorder %v401, %v412
    %vm419 = vcmp.lt.s32.totalorder %v402, %v412
    %vm420 = vcmp.lt.s32.totalorder %v403, %v412
    %vm421 = vcmp.lt.s32.totalorder %v404, %v412
    %vm422 = vcmp.lt.s32.totalorder %v405, %v412
    %vm423 = vcmp.lt.s32.totalorder %v406, %v412
    %vm424 = vcmp.lt.s32.totalorder %v407, %v412
    %vm425 = vcmp.lt.s32.totalorder %v408, %v412
    %vm426 = vcmp.lt.s32.totalorder %v409, %v412
    %vm427 = vcmp.lt.s32.totalorder %v410, %v412
    %vm428 = vcmp.lt.s32.totalorder %v411, %v412
    %v429 = vsel %vm413, %v362, 0.0
    %v430 = vsel %vm414, %v363, 0.0
    %v431 = vsel %vm415, %v364, 0.0
    %v432 = vsel %vm416, %v365, 0.0
    %v433 = vsel %vm417, %v366, 0.0
    %v434 = vsel %vm418, %v367, 0.0
    %v435 = vsel %vm419, %v368, 0.0
    %v436 = vsel %vm420, %v369, 0.0
    %v437 = vsel %vm421, %v370, 0.0
    %v438 = vsel %vm422, %v371, 0.0
    %v439 = vsel %vm423, %v372, 0.0
    %v440 = vsel %vm424, %v373, 0.0
    %v441 = vsel %vm425, %v374, 0.0
    %v442 = vsel %vm426, %v375, 0.0
    %v443 = vsel %vm427, %v376, 0.0
    %v444 = vsel %vm428, %v377, 0.0
    %v445 = vadd.f32 %v429, %v430
    %v446 = vadd.f32 %v445, %v431
    %v447 = vadd.f32 %v446, %v432
    %v448 = vadd.f32 %v447, %v433
    %v449 = vadd.f32 %v448, %v434
    %v450 = vadd.f32 %v449, %v435
    %v451 = vadd.f32 %v450, %v436
    %v452 = vadd.f32 %v451, %v437
    %v453 = vadd.f32 %v452, %v438
    %v454 = vadd.f32 %v453, %v439
    %v455 = vadd.f32 %v454, %v440
    %v456 = vadd.f32 %v455, %v441
    %v457 = vadd.f32 %v456, %v442
    %v458 = vadd.f32 %v457, %v443
    %v459 = vadd.f32 %v458, %v444
    %v460 = vadd.f32 %v459, 0.0
    %461 = vst [vmem:[#allocation7] sm:$0xff] %v460
    // Predicated region
    $region18: #{tpu_custom_call.1} parent=1 // pred_check
      _
    $region19: #{tpu_custom_call.1} parent=1 // pred_check_branch
      %463 = sbr.rel (0) target = $region21
    $region20: #{tpu_custom_call.1} parent=1 // pred_region
      %s465 = ssub.s32 128, 128
      %466 = vsyncadd [#allocation4], %s465
      %s468 = sshll.u32 [#allocation7], 4
      %s469 = int_to_ptr.vmem [resolvable:$true] %s468
      %471 = dma.vmem_to_hbm [thread:$0]  %s469, 128, %s2, [#allocation4]
    $region21: #{tpu_custom_call.1} parent=1 // pred_fallthru
      _
    // Predicated region
    $region22: #{tpu_custom_call.1} parent=1 // pred_check
      _
    $region23: #{tpu_custom_call.1} parent=1 // pred_check_branch
      %473 = sbr.rel (0) target = $region25
    $region24: #{tpu_custom_call.1} parent=1 // pred_region
      %474 = dma.done [#allocation4], 128
    $region25: #{tpu_custom_call.1} parent=1 // pred_fallthru
      _
    %475 = vsyncpa [#allocation3], 1
    %476 = vsyncpa [#allocation6], 1
    %477 = vsyncpa [#allocation4], 1

</llo_original>
